<compile_context>
chip_gen: v7x
topology: tpu7x:2x2x1
jax: 0.10.0
libtpu: 0.0.40
codegen_flags: <defaults>
</compile_context>

<pallas_src>
import functools
import math

import jax
import jax.numpy as jnp
from jax import lax
from jax.experimental import pallas as pl
from jax.experimental.pallas import tpu as pltpu


def _relun_kernel(x_ref, o_ref, *, n):
    r = jnp.maximum(x_ref[...], 0)
    if float(n).is_integer():
        # Integer power -> VPU multiplies; keeps the kernel HBM-bound.
        y = lax.integer_pow(r, int(n))
    else:
        # Non-integer power: pow (exp/log on the EUP), matching torch semantics.
        y = r ** n
    o_ref[...] = y.astype(o_ref.dtype)


def _sublane_min(dtype):
    """Minimum second-minor tile size for this dtype on TPU."""
    bits = jnp.dtype(dtype).itemsize * 8
    return max(8, 256 // bits)  # 8 (32-bit), 16 (16-bit), 32 (8-bit)


def relu_n(x, n, *, target_block_bytes=2 << 20):
    """Elementwise relu(x)**n via a Pallas TPU kernel. Any shape / float dtype."""
    orig_shape = x.shape
    dtype = x.dtype
    total = math.prod(orig_shape) if orig_shape else 1
    if total == 0:
        return x

    itemsize = jnp.dtype(dtype).itemsize
    sub_min = _sublane_min(dtype)
    LANE = 128

    # ---- choose a lane-dense 2D view (pad-free whenever 128 | numel) ------
    ncols = None
    for cand in (4096, 2048, 1024, 512, 256, 128):
        if total % cand == 0:
            ncols = cand
            break
    pad = 0
    if ncols is None:
        # Ragged numel (not a multiple of 128): pad the flat tail only.
        # TODO(synk): handle the ragged tail with an in-kernel masked store to
        # avoid this extra copy; rare for NCHW activations.
        ncols = LANE
        pad = (-total) % LANE

    flat = x.reshape(-1)
    if pad:
        flat = jnp.pad(flat, (0, pad))
    nrows = (total + pad) // ncols
    x2d = flat.reshape(nrows, ncols)  # contiguous reshape: no copy

    # ---- block sizing: ~target_block_bytes, sublane-aligned rows ----------
    rows_per_block = max(sub_min, target_block_bytes // (ncols * itemsize))
    rows_per_block = (rows_per_block // sub_min) * sub_min
    if rows_per_block >= nrows:
        rows_per_block = nrows  # full-dim block is always legal
    grid = (pl.cdiv(nrows, rows_per_block),)

    kernel = functools.partial(_relun_kernel, n=n)
    out2d = pl.pallas_call(
        kernel,
        out_shape=jax.ShapeDtypeStruct((nrows, ncols), dtype),
        grid_spec=pltpu.PrefetchScalarGridSpec(
            num_scalar_prefetch=0,
            grid=grid,
            in_specs=[pl.BlockSpec((rows_per_block, ncols), lambda i: (i, 0))],
            out_specs=pl.BlockSpec((rows_per_block, ncols), lambda i: (i, 0)),
        ),
        compiler_params=pltpu.CompilerParams(
            dimension_semantics=("parallel",),  # megacore split on v7x
            vmem_limit_bytes=48 << 20,          # under v7x 64 MiB physical
        ),
    )(x2d)

    out = out2d.reshape(-1)
    if pad:
        out = out[:total]
    return out.reshape(orig_shape)


class ReLUn:
    """JAX/Pallas port of torchphysics ReLUn: forward(x) = relu(x) ** n."""

    def __init__(self, n):
        self.n = n

    def __call__(self, x):
        return relu_n(x, self.n)


if __name__ == "__main__":
    key = jax.random.PRNGKey(0)
    # Small NCHW-like input consistent with typical usage.
    x = jax.random.normal(key, (2, 4, 16, 16), dtype=jnp.float32)

    n = 2.0  # the power parameter of ReLUn
    module = ReLUn(n)

    out = jax.block_until_ready(module(x))

    # Reference check against plain JAX semantics of relu(x)**n.
    ref = jnp.maximum(x, 0.0) ** n
    assert out.shape == x.shape and out.dtype == x.dtype
    assert jnp.allclose(out, ref, atol=1e-6, rtol=1e-6)

    print("KERNEL_OK")
</pallas_src>

<mosaic_0001>
module attributes {stable_mosaic.version = 11 : i64} {
  func.func @_relun_kernel(%arg0: i32, %arg1: memref<1x2048xf32, #tpu.memory_space<vmem>>, %arg2: memref<1x2048xf32, #tpu.memory_space<vmem>>) attributes {dimension_semantics = [#tpu.dimension_semantics<parallel>], iteration_bounds = array<i64: 1>, scalar_prefetch = 0 : i64, scratch_operands = 0 : i64, tpu.core_type = #tpu.core_type<tc>, window_params = [{transform_indices = @transform_0, window_bounds = array<i64: 1, 2048>}, {transform_indices = @transform_1, window_bounds = array<i64: 1, 2048>}]} {
    %c0 = arith.constant 0 : index
    %c0_0 = arith.constant 0 : index
    %0 = vector.load %arg1[%c0, %c0_0] : memref<1x2048xf32, #tpu.memory_space<vmem>>, vector<1x2048xf32>
    %cst = arith.constant 0.000000e+00 : f32
    %1 = vector.broadcast %cst : f32 to vector<1x2048xf32>
    %2 = arith.maximumf %0, %1 : vector<1x2048xf32>
    %3 = arith.mulf %2, %2 : vector<1x2048xf32>
    %c0_1 = arith.constant 0 : index
    %c0_2 = arith.constant 0 : index
    %4 = vector.load %arg2[%c0_1, %c0_2] : memref<1x2048xf32, #tpu.memory_space<vmem>>, vector<1x2048xf32>
    tpu.vector_store %arg2[%c0_1, %c0_2], %3 {strides = array<i32>} : memref<1x2048xf32, #tpu.memory_space<vmem>>, vector<1x2048xf32>,
    return
  }
  func.func @transform_0(%arg0: i32) -> (i32, i32) {
    %c0_i32 = arith.constant 0 : i32
    %c0_i32_0 = arith.constant 0 : i32
    return %arg0, %c0_i32 : i32, i32
  }
  func.func @transform_1(%arg0: i32) -> (i32, i32) {
    %c0_i32 = arith.constant 0 : i32
    %c0_i32_0 = arith.constant 0 : i32
    return %arg0, %c0_i32 : i32, i32
  }
}

</mosaic_0001>

<llo_original>
// kernel: tpu_custom_call.1
$region0: #{tpu_custom_call.1}
  #allocation0 [shape = 'u32[]', space=smem, size = 0x4, offset = 0x4, fixed_abs, tag = 'smem constant byte address 0x4 - core index']
  #allocation1 [shape = 'u32[144,128]{1,0:T(1,128)}', space=vmem, size = 0x12000, scoped, tag = 'internal scratch']
  %s0 = inlined_call_operand.hbm [shape: f32[1,2048], index: 0, kind: input, shape index: {}]
  %s1 = inlined_call_operand.hbm [shape: f32[1,2048], index: 1, kind: output, shape index: {}]
  %s2 = sld [smem:[#allocation0]]
  $region18: #{tpu_custom_call.1} parent=0
    _
  %s4 = ssub.s32 1, %s2
  %s5 = scalar_select 0, %s4, %s2
  $region1: #{tpu_custom_call.1} parent=0
    #allocation2 [shape = 'u8[8192]{0}', space=vmem, size = 0x2000, scoped, tag = 'input window, operand 0, single buffered']
    #allocation3 [shape = 's32[1]{0}', space=sflag, size = 0x4, scoped, tag = 'scoped memory for tpu_custom_call.1']
    #allocation4 [shape = 's32[1]{0}', space=sflag, size = 0x4, scoped, tag = 'scoped memory for tpu_custom_call.1']
    #allocation5 [shape = 'u8[8192]{0}', space=vmem, size = 0x2000, scoped, tag = 'output window, operand 0, single buffered']
    %6 = vsyncpa [#allocation3], 0
    %7 = vsyncpa [#allocation4], 0
    // Predicated region
    $region2: #{tpu_custom_call.1} parent=1 // pred_check
      _
    $region3: #{tpu_custom_call.1} parent=1 // pred_check_branch
      %9 = sbr.rel (0) target = $region5
    $region4: #{tpu_custom_call.1} parent=1 // pred_region
      %s11 = ssub.s32 256, 256
      %12 = vsyncadd [#allocation3], %s11
      %s14 = sshll.u32 [#allocation2], 4
      %s15 = int_to_ptr.vmem [resolvable:$true] %s14
      %17 = dma.hbm_to_vmem [thread:$0]  %s0, 256, %s15, [#allocation3]
    $region5: #{tpu_custom_call.1} parent=1 // pred_fallthru
      _
    // Predicated region
    $region6: #{tpu_custom_call.1} parent=1 // pred_check
      _
    $region7: #{tpu_custom_call.1} parent=1 // pred_check_branch
      %19 = sbr.rel (0) target = $region9
    $region8: #{tpu_custom_call.1} parent=1 // pred_region
      %20 = dma.done [#allocation3], 256
    $region9: #{tpu_custom_call.1} parent=1 // pred_fallthru
      _
    %v21 = vld [vmem:[#allocation2] sm:$0xff]
    %v22 = vld [vmem:[#allocation2 + $0x8] sm:$0xff]
    %v23 = vmax.f32 %v21, 0.0
    %v24 = vmax.f32 %v22, 0.0
    %v25 = vmul.f32 %v23, %v23
    %v26 = vmul.f32 %v24, %v24
    %27 = vst [vmem:[#allocation5] sm:$0xff] %v25
    %28 = vst [vmem:[#allocation5 + $0x8] sm:$0xff] %v26
    // Predicated region
    $region10: #{tpu_custom_call.1} parent=1 // pred_check
      _
    $region11: #{tpu_custom_call.1} parent=1 // pred_check_branch
      %30 = sbr.rel (0) target = $region13
    $region12: #{tpu_custom_call.1} parent=1 // pred_region
      %s32 = ssub.s32 256, 256
      %33 = vsyncadd [#allocation4], %s32
      %s35 = sshll.u32 [#allocation5], 4
      %s36 = int_to_ptr.vmem [resolvable:$true] %s35
      %38 = dma.vmem_to_hbm [thread:$0]  %s36, 256, %s1, [#allocation4]
    $region13: #{tpu_custom_call.1} parent=1 // pred_fallthru
      _
    // Predicated region
    $region14: #{tpu_custom_call.1} parent=1 // pred_check
      _
    $region15: #{tpu_custom_call.1} parent=1 // pred_check_branch
      %40 = sbr.rel (0) target = $region17
    $region16: #{tpu_custom_call.1} parent=1 // pred_region
      %41 = dma.done [#allocation4], 256
    $region17: #{tpu_custom_call.1} parent=1 // pred_fallthru
      _
    %42 = vsyncpa [#allocation3], 1
    %43 = vsyncpa [#allocation4], 1

</llo_original>
